<compile_context>
chip_gen: v6e
topology: v6e:2x2x1
jax: 0.10.0
libtpu: 0.0.40
codegen_flags: <defaults>
</compile_context>

<pallas_src>
import functools
import math

import jax
import jax.numpy as jnp
from jax import lax
from jax.experimental import pallas as pl
from jax.experimental.pallas import tpu as pltpu


def _arcface_kernel(flag_ref, emb_ref, w_ref, labels_ref, inv_e_ref, inv_w_ref,
                    out_ref, *, s, m, tile_c, grid_c, c_axis, use_bf16_matmul):
    # flag_ref:   [grid_b*grid_c] int32 SMEM  (scalar-prefetched)
    # emb_ref:    [tile_b, E]
    # w_ref:      [E, tile_c]
    # labels_ref: [tile_b, 1] int32
    # inv_e_ref:  [tile_b, 1] f32   1 / max(||emb_row||, 1e-12)
    # inv_w_ref:  [1, tile_c] f32   1 / max(||W_col||, 1e-12)
    # out_ref:    [tile_b, tile_c]
    jc = pl.program_id(c_axis)        # class-tile index
    ib = pl.program_id(1 - c_axis)    # row-tile index

    # Raw MXU matmul straight off the input refs; normalization applied as two
    # cheap broadcast multiplies on the small result.
    if use_bf16_matmul:
        raw = jnp.dot(emb_ref[...].astype(jnp.bfloat16),
                      w_ref[...].astype(jnp.bfloat16),
                      preferred_element_type=jnp.float32)
    else:
        raw = jnp.dot(emb_ref[...], w_ref[...],
                      preferred_element_type=jnp.float32)

    logits = raw * inv_e_ref[...] * inv_w_ref[...]               # [tb, tc] f32
    s_f = jnp.float32(s)

    has_label = flag_ref[ib * grid_c + jc] != 0

    @pl.when(has_label)
    def _():
        # target = cos(acos(c) + m) = c*cos(m) - sqrt(1-c^2)*sin(m)
        c = jnp.clip(logits, -1.0 + 1e-7, 1.0 - 1e-7)
        cos_m = jnp.float32(math.cos(m))
        sin_m = jnp.float32(math.sin(m))
        target = c * cos_m - jnp.sqrt(1.0 - c * c) * sin_m
        tb = out_ref.shape[0]
        col_ids = jc * tile_c + lax.broadcasted_iota(jnp.int32, (tb, tile_c), 1)
        one_hot = col_ids == labels_ref[...]                     # [tb,1] -> [tb,tc]
        out_ref[...] = (jnp.where(one_hot, target, logits) * s_f).astype(
            out_ref.dtype)

    @pl.when(jnp.logical_not(has_label))
    def _():
        # No label column in this tile: margin math is a no-op, skip it.
        out_ref[...] = (logits * s_f).astype(out_ref.dtype)


def _vmem_budget_bytes():
    """~75% of this generation's VMEM capacity (fallback: 48 MiB)."""
    try:
        cap = int(pltpu.get_tpu_info().vmem_capacity_bytes)
    except Exception:
        cap = 64 << 20
    return int(cap * 3 // 4)


def _vmem_need_bytes(E, tile_b, tile_c):
    """Conservative f32 VMEM estimate with double-buffering + padding."""
    return 4 * (2 * E * tile_c          # W tile, double-buffered
                + 2 * tile_b * tile_c   # output tile, double-buffered
                + 2 * tile_b * E        # embedding tile, double-buffered
                + 4 * tile_b * 128      # labels + inv_emb, lane-padded, x2 bufs
                + 2 * 8 * tile_c        # inv_w, sublane-padded, x2 bufs
                ) + (2 << 20)           # headroom for compiler scratch / temps


def _pick_tile_c(C, E, tile_b, budget_bytes):
    """Largest multiple of 128 dividing C whose tiles fit the VMEM budget."""
    if C % 128 != 0:
        # TODO(synk): pad C to a multiple of 128 for lane-dense stores.
        return C
    for t in (4096, 3072, 2048, 1536, 1024, 768, 512, 384, 256, 128):
        if C % t == 0 and _vmem_need_bytes(E, tile_b, t) <= budget_bytes:
            return t
    return 128


def _pick_tile_b(B):
    if B <= 1024:
        return B
    for t in (1024, 768, 512, 256, 128, 64, 32, 16, 8):
        if B % t == 0:
            return t
    # TODO(synk): pad ragged batches instead of one huge resident row tile.
    return B


def arcface_forward(embeddings, labels, W, *, s=30.0, m=0.5,
                    tile_c=None, tile_b=None, use_bf16_matmul=False):
    """embeddings: [B, E] f32, labels: [B] int, W: [E, C] f32 -> [B, C] f32."""
    B, E = embeddings.shape
    E2, C = W.shape
    assert E == E2

    budget = _vmem_budget_bytes()
    if tile_b is None:
        tile_b = _pick_tile_b(B)
    assert B % tile_b == 0
    if tile_c is None:
        tile_c = _pick_tile_c(C, E, tile_b, budget)
    assert C % tile_c == 0, "num_classes must be a multiple of tile_c"

    grid_b = B // tile_b
    grid_c = C // tile_c

    labels_i32 = labels.astype(jnp.int32)
    labels_2d = labels_i32.reshape(B, 1)

    # Normalization reciprocals precomputed once (cheap fused XLA reductions).
    # 1 / max(sqrt(ss), 1e-12) == rsqrt(max(ss, 1e-24))
    inv_emb = lax.rsqrt(jnp.maximum(
        jnp.sum(embeddings.astype(jnp.float32) ** 2, axis=1, keepdims=True),
        1e-24))                                                   # [B, 1]
    inv_w = lax.rsqrt(jnp.maximum(
        jnp.sum(W.astype(jnp.float32) ** 2, axis=0, keepdims=True),
        1e-24))                                                   # [1, C]

    # Flat per-(row-tile, col-tile) flag: does this tile contain a label column?
    row_tile = jnp.arange(B, dtype=jnp.int32) // tile_b
    col_tile = labels_i32 // tile_c
    flags_flat = jnp.zeros((grid_b * grid_c,), jnp.int32).at[
        row_tile * grid_c + col_tile].max(1)

    # With a single row tile, put the class sweep on the leading grid axis so
    # the parallel axis has extent >= 2 (v7x has 2 TensorCores per chip). Both
    # axes are fully independent (no accumulators / scratch), so grid order is
    # free and both axes are marked parallel.
    c_major = (grid_b == 1 and grid_c > 1)
    if c_major:
        grid = (grid_c, grid_b)
        c_axis = 0
        emb_map = lambda jc, ib, flags: (ib, 0)
        w_map = lambda jc, ib, flags: (0, jc)
        lbl_map = lambda jc, ib, flags: (ib, 0)
        inv_e_map = lambda jc, ib, flags: (ib, 0)
        inv_w_map = lambda jc, ib, flags: (0, jc)
        out_map = lambda jc, ib, flags: (ib, jc)
    else:
        grid = (grid_b, grid_c)
        c_axis = 1
        emb_map = lambda ib, jc, flags: (ib, 0)
        w_map = lambda ib, jc, flags: (0, jc)
        lbl_map = lambda ib, jc, flags: (ib, 0)
        inv_e_map = lambda ib, jc, flags: (ib, 0)
        inv_w_map = lambda ib, jc, flags: (0, jc)
        out_map = lambda ib, jc, flags: (ib, jc)

    kernel = functools.partial(
        _arcface_kernel, s=s, m=m, tile_c=tile_c, grid_c=grid_c,
        c_axis=c_axis, use_bf16_matmul=use_bf16_matmul)

    need = _vmem_need_bytes(E, tile_b, tile_c)
    vmem_limit = min(max(need, 32 << 20), budget)
    vmem_limit = int(max(vmem_limit, need))

    return pl.pallas_call(
        kernel,
        out_shape=jax.ShapeDtypeStruct((B, C), jnp.float32),
        grid_spec=pltpu.PrefetchScalarGridSpec(
            num_scalar_prefetch=1,
            grid=grid,
            in_specs=[
                pl.BlockSpec((tile_b, E), emb_map),       # embeddings row tile
                pl.BlockSpec((E, tile_c), w_map),         # W column tile
                pl.BlockSpec((tile_b, 1), lbl_map),       # labels
                pl.BlockSpec((tile_b, 1), inv_e_map),     # 1/||emb_row||
                pl.BlockSpec((1, tile_c), inv_w_map),     # 1/||W_col||
            ],
            out_specs=pl.BlockSpec((tile_b, tile_c), out_map),
        ),
        compiler_params=pltpu.CompilerParams(
            dimension_semantics=("parallel", "parallel"),
            vmem_limit_bytes=vmem_limit,
        ),
    )(flags_flat, embeddings, W, labels_2d, inv_emb, inv_w)


def _reference(embeddings, labels, W, s=30.0, m=0.5):
    emb = embeddings / jnp.maximum(
        jnp.linalg.norm(embeddings, axis=1, keepdims=True), 1e-12)
    Wn = W / jnp.maximum(jnp.linalg.norm(W, axis=0, keepdims=True), 1e-12)
    logits = emb @ Wn
    theta = jnp.arccos(jnp.clip(logits, -1.0 + 1e-7, 1.0 - 1e-7))
    target = jnp.cos(theta + m)
    one_hot = jax.nn.one_hot(labels, W.shape[1], dtype=logits.dtype)
    return (one_hot * target + (1.0 - one_hot) * logits) * s


def _make_inputs(key, batch, embedding_size, num_classes):
    k_emb, k_w, k_lbl = jax.random.split(key, 3)
    embeddings = jax.random.normal(k_emb, (batch, embedding_size), jnp.float32)
    # xavier_uniform_ on W[embedding_size, num_classes]
    bound = (6.0 / (embedding_size + num_classes)) ** 0.5
    W = jax.random.uniform(
        k_w, (embedding_size, num_classes), jnp.float32, -bound, bound)
    labels = jax.random.randint(k_lbl, (batch,), 0, num_classes, jnp.int32)
    return embeddings, labels, W


if __name__ == "__main__":
    key = jax.random.PRNGKey(0)
    s, m = 30.0, 0.5

    # Case 1: single tile (matches the original module defaults at small size).
    emb, lbl, W = _make_inputs(key, batch=8, embedding_size=128, num_classes=256)
    out = jax.block_until_ready(arcface_forward(emb, lbl, W, s=s, m=m))
    ref = _reference(emb, lbl, W, s=s, m=m)
    assert out.shape == (8, 256)
    assert jnp.allclose(out, ref, atol=1e-4, rtol=1e-4), (
        float(jnp.max(jnp.abs(out - ref))))

    # Case 2: multi row-tile + multi class-tile (exercises the flag-gated
    # margin skip and the row-major grid path).
    emb, lbl, W = _make_inputs(jax.random.PRNGKey(1), batch=16,
                               embedding_size=128, num_classes=512)
    out = jax.block_until_ready(
        arcface_forward(emb, lbl, W, s=s, m=m, tile_b=8, tile_c=128))
    ref = _reference(emb, lbl, W, s=s, m=m)
    assert jnp.allclose(out, ref, atol=1e-4, rtol=1e-4), (
        float(jnp.max(jnp.abs(out - ref))))

    # Case 3: single row tile, many class tiles (exercises the class-major
    # grid order used to keep the parallel axis >= 2 on v7x).
    emb, lbl, W = _make_inputs(jax.random.PRNGKey(2), batch=8,
                               embedding_size=128, num_classes=512)
    out = jax.block_until_ready(
        arcface_forward(emb, lbl, W, s=s, m=m, tile_c=128))
    ref = _reference(emb, lbl, W, s=s, m=m)
    assert jnp.allclose(out, ref, atol=1e-4, rtol=1e-4), (
        float(jnp.max(jnp.abs(out - ref))))

    print("KERNEL_OK")
</pallas_src>

<mosaic_0001>
module attributes {stable_mosaic.version = 11 : i64} {
  func.func @_arcface_kernel(%arg0: i32, %arg1: i32, %arg2: memref<1xi32, #tpu.memory_space<smem>>, %arg3: memref<8x128xf32, #tpu.memory_space<vmem>>, %arg4: memref<128x256xf32, #tpu.memory_space<vmem>>, %arg5: memref<8x1xi32, #tpu.memory_space<vmem>>, %arg6: memref<8x1xf32, #tpu.memory_space<vmem>>, %arg7: memref<1x256xf32, #tpu.memory_space<vmem>>, %arg8: memref<8x256xf32, #tpu.memory_space<vmem>>) attributes {dimension_semantics = [#tpu.dimension_semantics<parallel>, #tpu.dimension_semantics<parallel>], iteration_bounds = array<i64: 1, 1>, scalar_prefetch = 1 : i64, scratch_operands = 0 : i64, tpu.core_type = #tpu.core_type<tc>, window_params = [{transform_indices = @transform_0, window_bounds = array<i64: 8, 128>}, {transform_indices = @transform_1, window_bounds = array<i64: 128, 256>}, {transform_indices = @transform_2, window_bounds = array<i64: 8, 1>}, {transform_indices = @transform_3, window_bounds = array<i64: 8, 1>}, {transform_indices = @transform_4, window_bounds = array<i64: 1, 256>}, {transform_indices = @transform_5, window_bounds = array<i64: 8, 256>}]} {
    %c0 = arith.constant 0 : index
    %c0_0 = arith.constant 0 : index
    %0 = vector.load %arg3[%c0, %c0_0] : memref<8x128xf32, #tpu.memory_space<vmem>>, vector<8x128xf32>
    %c0_1 = arith.constant 0 : index
    %c0_2 = arith.constant 0 : index
    %1 = vector.load %arg4[%c0_1, %c0_2] : memref<128x256xf32, #tpu.memory_space<vmem>>, vector<128x256xf32>
    %cst = arith.constant dense<0.000000e+00> : vector<8x256xf32>
    %2 = tpu.matmul %0, %1, %cst {dimension_numbers = #tpu.dot_dimension_numbers<[1], [0], [0], [1], [0, 0, 1, 1], [], []>} : vector<8x128xf32>, vector<128x256xf32>, vector<8x256xf32> -> vector<8x256xf32>
    %c0_3 = arith.constant 0 : index
    %c0_4 = arith.constant 0 : index
    %3 = vector.load %arg6[%c0_3, %c0_4] : memref<8x1xf32, #tpu.memory_space<vmem>>, vector<8x1xf32>
    %4 = vector.broadcast %3 : vector<8x1xf32> to vector<8x256xf32>
    %5 = arith.mulf %2, %4 : vector<8x256xf32>
    %c0_5 = arith.constant 0 : index
    %c0_6 = arith.constant 0 : index
    %6 = vector.load %arg7[%c0_5, %c0_6] : memref<1x256xf32, #tpu.memory_space<vmem>>, vector<1x256xf32>
    %7 = vector.broadcast %6 : vector<1x256xf32> to vector<8x256xf32>
    %8 = arith.mulf %5, %7 : vector<8x256xf32>
    %c1_i32 = arith.constant 1 : i32
    %9 = arith.muli %arg0, %c1_i32 : i32
    %10 = arith.addi %9, %arg1 : i32
    %11 = arith.index_cast %10 : i32 to index
    %12 = memref.load %arg2[%11] : memref<1xi32, #tpu.memory_space<smem>>
    %c0_i32 = arith.constant 0 : i32
    %13 = arith.cmpi ne, %12, %c0_i32 : i32
    %14 = arith.extui %13 : i1 to i32
    %cst_7 = arith.constant 3.000000e+01 : f32
    %c0_i32_8 = arith.constant 0 : i32
    %15 = arith.cmpi ne, %14, %c0_i32_8 : i32
    scf.if %15 {
      %cst_11 = arith.constant -0.99999988 : f32
      %cst_12 = arith.constant 0.99999988 : f32
      %19 = vector.broadcast %cst_11 : f32 to vector<8x256xf32>
      %20 = arith.maximumf %19, %8 : vector<8x256xf32>
      %21 = vector.broadcast %cst_12 : f32 to vector<8x256xf32>
      %22 = arith.minimumf %21, %20 : vector<8x256xf32>
      %cst_13 = arith.constant 0.87758255 : f32
      %23 = vector.broadcast %cst_13 : f32 to vector<8x256xf32>
      %24 = arith.mulf %22, %23 : vector<8x256xf32>
      %25 = arith.mulf %22, %22 : vector<8x256xf32>
      %cst_14 = arith.constant 1.000000e+00 : f32
      %26 = vector.broadcast %cst_14 : f32 to vector<8x256xf32>
      %27 = arith.subf %26, %25 : vector<8x256xf32>
      %28 = math.sqrt %27 : vector<8x256xf32>
      %cst_15 = arith.constant 0.47942555 : f32
      %29 = vector.broadcast %cst_15 : f32 to vector<8x256xf32>
      %30 = arith.mulf %28, %29 : vector<8x256xf32>
      %31 = arith.subf %24, %30 : vector<8x256xf32>
      %c256_i32 = arith.constant 256 : i32
      %32 = arith.muli %arg1, %c256_i32 : i32
      %33 = tpu.iota {dimensions = array<i32: 1>} : vector<8x256xi32>
      %34 = vector.broadcast %32 : i32 to vector<8x256xi32>
      %35 = arith.addi %34, %33 : vector<8x256xi32>
      %c0_16 = arith.constant 0 : index
      %c0_17 = arith.constant 0 : index
      %36 = vector.load %arg5[%c0_16, %c0_17] : memref<8x1xi32, #tpu.memory_space<vmem>>, vector<8x1xi32>
      %37 = vector.broadcast %36 : vector<8x1xi32> to vector<8x256xi32>
      %38 = arith.cmpi eq, %35, %37 : vector<8x256xi32>
      %39 = arith.select %38, %31, %8 : vector<8x256xi1>, vector<8x256xf32>
      %40 = vector.broadcast %cst_7 : f32 to vector<8x256xf32>
      %41 = arith.mulf %39, %40 : vector<8x256xf32>
      %c0_18 = arith.constant 0 : index
      %c0_19 = arith.constant 0 : index
      %42 = vector.load %arg8[%c0_18, %c0_19] : memref<8x256xf32, #tpu.memory_space<vmem>>, vector<8x256xf32>
      tpu.vector_store %arg8[%c0_18, %c0_19], %41 {strides = array<i32>} : memref<8x256xf32, #tpu.memory_space<vmem>>, vector<8x256xf32>,
    } else {
    }
    %true = arith.constant true
    %16 = arith.xori %13, %true : i1
    %17 = arith.extui %16 : i1 to i32
    %cst_9 = arith.constant 3.000000e+01 : f32
    %c0_i32_10 = arith.constant 0 : i32
    %18 = arith.cmpi ne, %17, %c0_i32_10 : i32
    scf.if %18 {
      %19 = vector.broadcast %cst_9 : f32 to vector<8x256xf32>
      %20 = arith.mulf %8, %19 : vector<8x256xf32>
      %c0_11 = arith.constant 0 : index
      %c0_12 = arith.constant 0 : index
      %21 = vector.load %arg8[%c0_11, %c0_12] : memref<8x256xf32, #tpu.memory_space<vmem>>, vector<8x256xf32>
      tpu.vector_store %arg8[%c0_11, %c0_12], %20 {strides = array<i32>} : memref<8x256xf32, #tpu.memory_space<vmem>>, vector<8x256xf32>,
    } else {
    }
    return
  }
  func.func @transform_0(%arg0: i32, %arg1: i32, %arg2: memref<1xi32, #tpu.memory_space<smem>>) -> (i32, i32) {
    %c0_i32 = arith.constant 0 : i32
    %c0_i32_0 = arith.constant 0 : i32
    return %arg0, %c0_i32 : i32, i32
  }
  func.func @transform_1(%arg0: i32, %arg1: i32, %arg2: memref<1xi32, #tpu.memory_space<smem>>) -> (i32, i32) {
    %c0_i32 = arith.constant 0 : i32
    %c0_i32_0 = arith.constant 0 : i32
    return %c0_i32, %arg1 : i32, i32
  }
  func.func @transform_2(%arg0: i32, %arg1: i32, %arg2: memref<1xi32, #tpu.memory_space<smem>>) -> (i32, i32) {
    %c0_i32 = arith.constant 0 : i32
    %c0_i32_0 = arith.constant 0 : i32
    return %arg0, %c0_i32 : i32, i32
  }
  func.func @transform_3(%arg0: i32, %arg1: i32, %arg2: memref<1xi32, #tpu.memory_space<smem>>) -> (i32, i32) {
    %c0_i32 = arith.constant 0 : i32
    %c0_i32_0 = arith.constant 0 : i32
    return %arg0, %c0_i32 : i32, i32
  }
  func.func @transform_4(%arg0: i32, %arg1: i32, %arg2: memref<1xi32, #tpu.memory_space<smem>>) -> (i32, i32) {
    %c0_i32 = arith.constant 0 : i32
    %c0_i32_0 = arith.constant 0 : i32
    return %c0_i32, %arg1 : i32, i32
  }
  func.func @transform_5(%arg0: i32, %arg1: i32, %arg2: memref<1xi32, #tpu.memory_space<smem>>) -> (i32, i32) {
    %c0_i32 = arith.constant 0 : i32
    return %arg0, %arg1 : i32, i32
  }
}

</mosaic_0001>

<llo_original>
// kernel: tpu_custom_call.1
$region0: #{tpu_custom_call.1}
  #allocation0 [shape = 'u32[]', space=smem, size = 0x4, offset = 0x4, fixed_abs, tag = 'smem constant byte address 0x4 - core index']
  #allocation1 [shape = 'u32[144,128]{1,0:T(1,128)}', space=vmem, size = 0x12000, scoped, tag = 'internal scratch']
  #allocation2 [shape = 's32[1]{0}', space=sflag, size = 0x4, scoped, tag = 'scoped memory for tpu_custom_call.1']
  #allocation3 [shape = 's32[1]{0:T(128)S(6)}', space=smem, size = 0x200, scoped, tag = 'prefetched SMEM operand 0']
  %s0 = inlined_call_operand.<no memory space> [shape: s32[1], index: 0, kind: input, shape index: {}]
  %s1 = inlined_call_operand.vmem [shape: f32[8,128], index: 1, kind: input, shape index: {}]
  %s2 = inlined_call_operand.hbm [shape: f32[128,256], index: 2, kind: input, shape index: {}]
  %s3 = inlined_call_operand.vmem [shape: s32[8,1], index: 3, kind: input, shape index: {}]
  %s4 = inlined_call_operand.vmem [shape: f32[8,1], index: 4, kind: input, shape index: {}]
  %s5 = inlined_call_operand.vmem [shape: f32[1,256], index: 5, kind: input, shape index: {}]
  %s6 = inlined_call_operand.hbm [shape: f32[8,256], index: 6, kind: output, shape index: {}]
  %s7 = sld [smem:[#allocation0]]
  $region42: #{tpu_custom_call.1} parent=0
    _
  %s9 = ssub.s32 1, %s7
  %s10 = scalar_select 0, %s9, %s7
  %11 = sst [smem:[#allocation3]] %s0
  $region1: #{tpu_custom_call.1} parent=0
    #allocation4 [shape = 'u8[131072]{0}', space=vmem, size = 0x20000, scoped, tag = 'input window, operand 2, single buffered']
    #allocation5 [shape = 's32[1]{0}', space=sflag, size = 0x4, scoped, tag = 'scoped memory for tpu_custom_call.1']
    #allocation6 [shape = 's32[1]{0}', space=sflag, size = 0x4, scoped, tag = 'scoped memory for tpu_custom_call.1']
    #allocation7 [shape = 'u8[8192]{0}', space=vmem, size = 0x2000, scoped, tag = 'output window, operand 0, single buffered']
    %12 = vsyncpa [#allocation5], 0
    %13 = vsyncpa [#allocation6], 0
    // Predicated region
    $region2: #{tpu_custom_call.1} parent=1 // pred_check
      _
    $region3: #{tpu_custom_call.1} parent=1 // pred_check_branch
      %15 = sbr.rel (0) target = $region5
    $region4: #{tpu_custom_call.1} parent=1 // pred_region
      _
    $region5: #{tpu_custom_call.1} parent=1 // pred_fallthru
      _
    // Predicated region
    $region6: #{tpu_custom_call.1} parent=1 // pred_check
      _
    $region7: #{tpu_custom_call.1} parent=1 // pred_check_branch
      %17 = sbr.rel (0) target = $region9
    $region8: #{tpu_custom_call.1} parent=1 // pred_region
      %s19 = ssub.s32 4096, 4096
      %20 = vsyncadd [#allocation5], %s19
      %s21 = sshll.u32 [#allocation4], 4
      %s22 = int_to_ptr.vmem [resolvable:$true] %s21
      %27 = dma.hbm_to_vmem [thread:$0]  %s2, 4096, %s22, [#allocation5], 256, 256, 16
    $region9: #{tpu_custom_call.1} parent=1 // pred_fallthru
      _
    // Predicated region
    $region10: #{tpu_custom_call.1} parent=1 // pred_check
      _
    $region11: #{tpu_custom_call.1} parent=1 // pred_check_branch
      %29 = sbr.rel (0) target = $region13
    $region12: #{tpu_custom_call.1} parent=1 // pred_region
      _
    $region13: #{tpu_custom_call.1} parent=1 // pred_fallthru
      _
    // Predicated region
    $region14: #{tpu_custom_call.1} parent=1 // pred_check
      _
    $region15: #{tpu_custom_call.1} parent=1 // pred_check_branch
      %31 = sbr.rel (0) target = $region17
    $region16: #{tpu_custom_call.1} parent=1 // pred_region
      _
    $region17: #{tpu_custom_call.1} parent=1 // pred_fallthru
      _
    // Predicated region
    $region18: #{tpu_custom_call.1} parent=1 // pred_check
      _
    $region19: #{tpu_custom_call.1} parent=1 // pred_check_branch
      %33 = sbr.rel (0) target = $region21
    $region20: #{tpu_custom_call.1} parent=1 // pred_region
      _
    $region21: #{tpu_custom_call.1} parent=1 // pred_fallthru
      _
    // Predicated region
    $region22: #{tpu_custom_call.1} parent=1 // pred_check
      _
    $region23: #{tpu_custom_call.1} parent=1 // pred_check_branch
      %35 = sbr.rel (0) target = $region25
    $region24: #{tpu_custom_call.1} parent=1 // pred_region
      %36 = dma.done [#allocation5], 4096
    $region25: #{tpu_custom_call.1} parent=1 // pred_fallthru
      _
    %v37 = vld [vmem:[%s1] sm:$0xff]
    %v38 = vld [vmem:[#allocation4] sm:$0xff]
    %v39 = vld [vmem:[#allocation4 + $0x8] sm:$0xff]
    %v40 = vld [vmem:[#allocation4 + $0x10] sm:$0xff]
    %v41 = vld [vmem:[#allocation4 + $0x18] sm:$0xff]
    %v42 = vld [vmem:[#allocation4 + $0x20] sm:$0xff]
    %v43 = vld [vmem:[#allocation4 + $0x28] sm:$0xff]
    %v44 = vld [vmem:[#allocation4 + $0x30] sm:$0xff]
    %v45 = vld [vmem:[#allocation4 + $0x38] sm:$0xff]
    %v46 = vld [vmem:[#allocation4 + $0x40] sm:$0xff]
    %v47 = vld [vmem:[#allocation4 + $0x48] sm:$0xff]
    %v48 = vld [vmem:[#allocation4 + $0x50] sm:$0xff]
    %v49 = vld [vmem:[#allocation4 + $0x58] sm:$0xff]
    %v50 = vld [vmem:[#allocation4 + $0x60] sm:$0xff]
    %v51 = vld [vmem:[#allocation4 + $0x68] sm:$0xff]
    %v52 = vld [vmem:[#allocation4 + $0x70] sm:$0xff]
    %v53 = vld [vmem:[#allocation4 + $0x78] sm:$0xff]
    %v54 = vld [vmem:[#allocation4 + $0x80] sm:$0xff]
    %v55 = vld [vmem:[#allocation4 + $0x88] sm:$0xff]
    %v56 = vld [vmem:[#allocation4 + $0x90] sm:$0xff]
    %v57 = vld [vmem:[#allocation4 + $0x98] sm:$0xff]
    %v58 = vld [vmem:[#allocation4 + $0xa0] sm:$0xff]
    %v59 = vld [vmem:[#allocation4 + $0xa8] sm:$0xff]
    %v60 = vld [vmem:[#allocation4 + $0xb0] sm:$0xff]
    %v61 = vld [vmem:[#allocation4 + $0xb8] sm:$0xff]
    %v62 = vld [vmem:[#allocation4 + $0xc0] sm:$0xff]
    %v63 = vld [vmem:[#allocation4 + $0xc8] sm:$0xff]
    %v64 = vld [vmem:[#allocation4 + $0xd0] sm:$0xff]
    %v65 = vld [vmem:[#allocation4 + $0xd8] sm:$0xff]
    %v66 = vld [vmem:[#allocation4 + $0xe0] sm:$0xff]
    %v67 = vld [vmem:[#allocation4 + $0xe8] sm:$0xff]
    %v68 = vld [vmem:[#allocation4 + $0xf0] sm:$0xff]
    %v69 = vld [vmem:[#allocation4 + $0xf8] sm:$0xff]
    %70 = vmatprep.subr.mxu0 %v69
    %71 = vmatpush1.msra.mxu0 %v68
    %72 = vmatprep.subr.mxu0 %v67
    %73 = vmatpush1.msra.mxu0 %v66
    %74 = vmatprep.subr.mxu0 %v65
    %75 = vmatpush1.msra.mxu0 %v64
    %76 = vmatprep.subr.mxu0 %v63
    %77 = vmatpush1.msra.mxu0 %v62
    %78 = vmatprep.subr.mxu0 %v61
    %79 = vmatpush1.msra.mxu0 %v60
    %80 = vmatprep.subr.mxu0 %v59
    %81 = vmatpush1.msra.mxu0 %v58
    %82 = vmatprep.subr.mxu0 %v57
    %83 = vmatpush1.msra.mxu0 %v56
    %84 = vmatprep.subr.mxu0 %v55
    %85 = vmatpush1.msra.mxu0 %v54
    %86 = vmatprep.subr.mxu0 %v53
    %87 = vmatpush1.msra.mxu0 %v52
    %88 = vmatprep.subr.mxu0 %v51
    %89 = vmatpush1.msra.mxu0 %v50
    %90 = vmatprep.subr.mxu0 %v49
    %91 = vmatpush1.msra.mxu0 %v48
    %92 = vmatprep.subr.mxu0 %v47
    %93 = vmatpush1.msra.mxu0 %v46
    %94 = vmatprep.subr.mxu0 %v45
    %95 = vmatpush1.msra.mxu0 %v44
    %96 = vmatprep.subr.mxu0 %v43
    %97 = vmatpush1.msra.mxu0 %v42
    %98 = vmatprep.subr.mxu0 %v41
    %99 = vmatpush1.msra.mxu0 %v40
    %100 = vmatprep.subr.mxu0 %v39
    %101 = vmatpush1.msra.mxu0 %v38
    %102 = vmatprep.subr.mxu0 0.0
    %103 = vmatpush2.msra.mxu0 0.0
    %104 = vmatprep.subr.mxu0 0.0
    %105 = vmatpush2.msra.mxu0 0.0
    %106 = vmatprep.subr.mxu0 0.0
    %107 = vmatpush2.msra.mxu0 0.0
    %108 = vmatprep.subr.mxu0 0.0
    %109 = vmatpush2.msra.mxu0 0.0
    %110 = vmatprep.subr.mxu0 0.0
    %111 = vmatpush2.msra.mxu0 0.0
    %112 = vmatprep.subr.mxu0 0.0
    %113 = vmatpush2.msra.mxu0 0.0
    %114 = vmatprep.subr.mxu0 0.0
    %115 = vmatpush2.msra.mxu0 0.0
    %116 = vmatprep.subr.mxu0 0.0
    %117 = vmatpush2.msra.mxu0 0.0
    %118 = vmatprep.subr.mxu0 0.0
    %119 = vmatpush2.msra.mxu0 0.0
    %120 = vmatprep.subr.mxu0 0.0
    %121 = vmatpush2.msra.mxu0 0.0
    %122 = vmatprep.subr.mxu0 0.0
    %123 = vmatpush2.msra.mxu0 0.0
    %124 = vmatprep.subr.mxu0 0.0
    %125 = vmatpush2.msra.mxu0 0.0
    %126 = vmatprep.subr.mxu0 0.0
    %127 = vmatpush2.msra.mxu0 0.0
    %128 = vmatprep.subr.mxu0 0.0
    %129 = vmatpush2.msra.mxu0 0.0
    %130 = vmatprep.subr.mxu0 0.0
    %131 = vmatpush2.msra.mxu0 0.0
    %132 = vmatprep.subr.mxu0 0.0
    %133 = vmatpush2.msra.mxu0 0.0
    %134 = vmatprep.mubr.f32.mxu0 0.0
    %135 = vmatmul.mubr.f32.gmra.mxu0 %v37
    %v136 = vpop.f32.mrf.mxu0
    %v137 = vadd.f32 0.0, %v136
    %v138 = vpop.f32.mrf.mxu0
    %v139 = vadd.f32 0.0, %v138
    %140 = vdwg.mxu0
    %v141 = vld [vmem:[%s4] sm:$0xff]
    %143 = vset.pattern.permute.xlu0 0
    %144 = vperm.xlu0 %143, %v141
    %v145 = vpop.permute.xlu0 %144
    %v147 = vmul.f32 %v137, %v145
    %v148 = vmul.f32 %v139, %v145
    %v149 = vld [vmem:[%s5] sm:$0x3]
    %v151 = vlaneseq
    %v152 = vshrl.u32 %v151, 7
    %v153 = vsub.s32 0, %v152
    %v154 = vrot.slane %v149, %v153
    %v155 = vlaneseq
    %v156 = vshrl.u32 %v155, 7
    %v157 = vsub.s32 1, %v156
    %v158 = vrot.slane %v149, %v157
    %v161 = vmul.f32 %v147, %v154
    %v162 = vmul.f32 %v148, %v158
    %s163 = sadd.s32 0, 0
    %s164 = sld [smem:[#allocation3 + %s163]]
    %p165 = scmp.ne.s32.totalorder %s164, 0
    // Predicated region
    $region26: #{tpu_custom_call.1} parent=1 // pred_check
      %p166 = pneg %p165
    $region27: #{tpu_custom_call.1} parent=1 // pred_check_branch
      %168 = sbr.rel (%p166) target = $region29
    $region28: #{tpu_custom_call.1} parent=1 // pred_region
      %v169 = vmax.f32 %v161, -0.9999999
      %v170 = vmax.f32 %v162, -0.9999999
      %v171 = vmin.f32 %v169, 0.9999999
      %v172 = vmin.f32 %v170, 0.9999999
      %v173 = vmul.f32 %v171, 0.87758255
      %v174 = vmul.f32 %v172, 0.87758255
      %v175 = vmul.f32 %v171, %v171
      %v176 = vmul.f32 %v172, %v172
      %v177 = vsub.f32 1.0, %v175
      %v178 = vsub.f32 1.0, %v176
      %v179 = vrsqrt.pop %v177
      %v180 = vmul.f32 %v177, %v179
      %vm181 = vcmp.eq.f32.partialorder %v177, inf
      %v182 = vsel %vm181, %v177, %v180
      %vm183 = vcmp.eq.f32.partialorder %v177, 0.0
      %v184 = vand.u32 %v177, 2147483648
      %v185 = vsel %vm183, %v184, %v182
      %v186 = vrsqrt.pop %v178
      %v187 = vmul.f32 %v178, %v186
      %vm188 = vcmp.eq.f32.partialorder %v178, inf
      %v189 = vsel %vm188, %v178, %v187
      %vm190 = vcmp.eq.f32.partialorder %v178, 0.0
      %v191 = vand.u32 %v178, 2147483648
      %v192 = vsel %vm190, %v191, %v189
      %v193 = vmul.f32 %v185, 0.47942555
      %v194 = vmul.f32 %v192, 0.47942555
      %v195 = vsub.f32 %v173, %v193
      %v196 = vsub.f32 %v174, %v194
      %s197 = smul.u32 0, 256
      %v198 = vlaneseq
      %v199 = vand.u32 %v198, 127
      %v200 = vadd.s32 %v199, 128
      %v201 = vstv %s197
      %v202 = vadd.s32 %v201, %v199
      %v203 = vadd.s32 %v201, %v200
      %v204 = vld [vmem:[%s3] sm:$0xff]
      %205 = vset.pattern.permute.xlu0 0
      %206 = vperm.xlu0 %205, %v204
      %v207 = vpop.permute.xlu0 %206
      %vm208 = vcmp.eq.s32.totalorder %v202, %v207
      %vm209 = vcmp.eq.s32.totalorder %v203, %v207
      %v210 = vsel %vm208, %v195, %v161
      %v211 = vsel %vm209, %v196, %v162
      %v212 = vmul.f32 %v210, 30.0
      %v213 = vmul.f32 %v211, 30.0
      %214 = vst [vmem:[#allocation7] sm:$0xff] %v212
      %215 = vst [vmem:[#allocation7 + $0x8] sm:$0xff] %v213
    $region29: #{tpu_custom_call.1} parent=1 // pred_fallthru
      _
    %p216 = pneg %p165
    // Predicated region
    $region30: #{tpu_custom_call.1} parent=1 // pred_check
      _
    $region31: #{tpu_custom_call.1} parent=1 // pred_check_branch
      %218 = sbr.rel (%p165) target = $region33
    $region32: #{tpu_custom_call.1} parent=1 // pred_region
      %v219 = vmul.f32 %v161, 30.0
      %v220 = vmul.f32 %v162, 30.0
      %221 = vst [vmem:[#allocation7] sm:$0xff] %v219
      %222 = vst [vmem:[#allocation7 + $0x8] sm:$0xff] %v220
    $region33: #{tpu_custom_call.1} parent=1 // pred_fallthru
      _
    // Predicated region
    $region34: #{tpu_custom_call.1} parent=1 // pred_check
      _
    $region35: #{tpu_custom_call.1} parent=1 // pred_check_branch
      %224 = sbr.rel (0) target = $region37
    $region36: #{tpu_custom_call.1} parent=1 // pred_region
      %s226 = ssub.s32 256, 256
      %227 = vsyncadd [#allocation6], %s226
      %s229 = sshll.u32 [#allocation7], 4
      %s230 = int_to_ptr.vmem [resolvable:$true] %s229
      %232 = dma.vmem_to_hbm [thread:$0]  %s230, 256, %s6, [#allocation6]
    $region37: #{tpu_custom_call.1} parent=1 // pred_fallthru
      _
    // Predicated region
    $region38: #{tpu_custom_call.1} parent=1 // pred_check
      _
    $region39: #{tpu_custom_call.1} parent=1 // pred_check_branch
      %234 = sbr.rel (0) target = $region41
    $region40: #{tpu_custom_call.1} parent=1 // pred_region
      %235 = dma.done [#allocation6], 256
    $region41: #{tpu_custom_call.1} parent=1 // pred_fallthru
      _
    %236 = vsyncpa [#allocation5], 1
    %237 = vsyncpa [#allocation6], 1

</llo_original>
